<compile_context>
chip_gen: v5e
topology: v5e:2x2
jax: 0.10.0
libtpu: 0.0.40
codegen_flags: <defaults>
</compile_context>

<pallas_src>
import jax
import jax.numpy as jnp
from jax.experimental import pallas as pl
from jax.experimental.pallas import tpu as pltpu


def moe_adapter_kernel(x_ref, gate_w_ref, w_cat_ref, eff_b_ref, out_ref):
    # x_ref     : (TB, Din)         input tile (native dtype)
    # gate_w_ref: (Din, E)          gating weight
    # w_cat_ref : (Din, E*Dout)     concat of per-expert W_e^T (lane-dense)
    # eff_b_ref : (1, E*Dout)       folded bias  lin_b[e] - pw_bias[e] @ W_e^T
    # out_ref   : (TB, Dout)
    x = x_ref[...]

    # Gating: softmax(x @ gate_weight) -- MXU matmul, f32 math, exact divide.
    logits = jnp.dot(x, gate_w_ref[...], preferred_element_type=jnp.float32)  # (TB, E)
    m = jnp.max(logits, axis=-1, keepdims=True)
    p = jnp.exp(logits - m)
    gate = p / jnp.sum(p, axis=-1, keepdims=True)                             # (TB, E)

    # All experts in a single lane-dense MXU dot.
    y = jnp.dot(x, w_cat_ref[...], preferred_element_type=jnp.float32)        # (TB, E*Dout)
    y = y + eff_b_ref[...]

    n_experts = gate_w_ref.shape[-1]
    dout = out_ref.shape[-1]
    # Weighted sum over experts via static slices of the fused result.
    # n_experts is small -> static unroll; switch to fori_loop if E grows.
    acc = gate[:, 0:1] * y[:, 0:dout]
    for e in range(1, n_experts):
        acc = acc + gate[:, e:e + 1] * y[:, e * dout:(e + 1) * dout]
    out_ref[...] = acc.astype(out_ref.dtype)


def moe_adapter_forward(x, gate_weight, pw_bias, expert_weight, expert_bias,
                        *, block_rows=512):
    """Inference-mode MoEAdapter.forward.

    x             : (B, Din)
    gate_weight   : (Din, E)
    pw_bias       : (E, Din)       per-expert PWLayer bias
    expert_weight : (E, Dout, Din) torch nn.Linear weight layout
    expert_bias   : (E, Dout)      per-expert nn.Linear bias
    returns       : (B, Dout)
    """
    B, Din = x.shape
    E, Dout, _ = expert_weight.shape

    # ---- one-time parameter prep (hoist to load time in production) ----
    # W_cat[:, e*Dout:(e+1)*Dout] = expert_weight[e].T   -> (Din, E*Dout)
    w_cat = jnp.transpose(expert_weight, (2, 0, 1)).reshape(Din, E * Dout)
    # eff_bias[e] = lin_b[e] - pw_bias[e] @ W_e^T
    eff_bias = expert_bias - jnp.einsum('ei,eoi->eo', pw_bias, expert_weight,
                                        preferred_element_type=jnp.float32)
    eff_bias = eff_bias.reshape(1, E * Dout).astype(jnp.float32)

    # ---- batch tiling: single big tile for small B, 512-row tiles otherwise ----
    itemsize = jnp.dtype(x.dtype).itemsize
    sub = {4: 8, 2: 16, 1: 32}.get(itemsize, 8)       # sublane packing per dtype
    b_pad = pl.cdiv(B, sub) * sub
    tb = min(block_rows, b_pad)
    b_pad = pl.cdiv(b_pad, tb) * tb
    x_in = jnp.pad(x, ((0, b_pad - B), (0, 0))) if b_pad != B else x

    out = pl.pallas_call(
        moe_adapter_kernel,
        out_shape=jax.ShapeDtypeStruct((b_pad, Dout), x.dtype),
        grid_spec=pltpu.PrefetchScalarGridSpec(
            num_scalar_prefetch=0,
            grid=(b_pad // tb,),
            in_specs=[
                pl.BlockSpec((tb, Din), lambda b: (b, 0)),          # x tile
                pl.BlockSpec((Din, E), lambda b: (0, 0)),           # gate weight
                pl.BlockSpec((Din, E * Dout), lambda b: (0, 0)),    # fused expert weights
                pl.BlockSpec((1, E * Dout), lambda b: (0, 0)),      # folded bias
            ],
            out_specs=pl.BlockSpec((tb, Dout), lambda b: (b, 0)),
        ),
        compiler_params=pltpu.CompilerParams(
            dimension_semantics=("parallel",),        # batch tiles shard across TCs
            vmem_limit_bytes=64 * 1024 * 1024,
        ),
    )(x_in, gate_weight, w_cat, eff_bias)
    return out[:B]


if __name__ == "__main__":
    # Small shapes consistent with the module:
    # PW_input_dim = PW_output_dim = 32, MoE_experts = 4, batch = 16.
    B, Din, Dout, E = 16, 32, 32, 4

    key = jax.random.PRNGKey(0)
    kx, kg, kb, kw, kc = jax.random.split(key, 5)

    x = jax.random.normal(kx, (B, Din), dtype=jnp.float32)
    gate_weight = 0.5 * jax.random.normal(kg, (Din, E), dtype=jnp.float32)
    pw_bias = 0.1 * jax.random.normal(kb, (E, Din), dtype=jnp.float32)
    expert_weight = 0.2 * jax.random.normal(kw, (E, Dout, Din), dtype=jnp.float32)
    expert_bias = 0.1 * jax.random.normal(kc, (E, Dout), dtype=jnp.float32)

    out = moe_adapter_forward(x, gate_weight, pw_bias, expert_weight, expert_bias)
    out = jax.block_until_ready(out)

    # Pure-JAX reference of MoEAdapter.forward (eval mode), accurate matmuls.
    with jax.default_matmul_precision("highest"):
        gate = jax.nn.softmax(x @ gate_weight, axis=-1)                       # (B, E)
        experts = jnp.stack(
            [(x - pw_bias[e]) @ expert_weight[e].T + expert_bias[e]
             for e in range(E)], axis=-2)                                     # (B, E, Dout)
        ref = jnp.sum(gate[..., None] * experts, axis=-2)                     # (B, Dout)
    ref = jax.block_until_ready(ref)

    assert out.shape == (B, Dout)
    max_err = float(jnp.max(jnp.abs(out - ref)))
    # Tolerance covers TPU default-precision matmul rounding (kernel side).
    assert jnp.allclose(out, ref, atol=2e-2, rtol=2e-2), max_err

    print("KERNEL_OK")
</pallas_src>

<mosaic_0001>
module attributes {stable_mosaic.version = 11 : i64} {
  func.func @moe_adapter_kernel(%arg0: i32, %arg1: memref<16x32xf32, #tpu.memory_space<vmem>>, %arg2: memref<32x4xf32, #tpu.memory_space<vmem>>, %arg3: memref<32x128xf32, #tpu.memory_space<vmem>>, %arg4: memref<1x128xf32, #tpu.memory_space<vmem>>, %arg5: memref<16x32xf32, #tpu.memory_space<vmem>>) attributes {dimension_semantics = [#tpu.dimension_semantics<parallel>], iteration_bounds = array<i64: 1>, scalar_prefetch = 0 : i64, scratch_operands = 0 : i64, tpu.core_type = #tpu.core_type<tc>, window_params = [{transform_indices = @transform_0, window_bounds = array<i64: 16, 32>}, {pipeline_mode = #tpu.pipeline_mode<synchronous>, transform_indices = @transform_1, window_bounds = array<i64: 32, 4>}, {pipeline_mode = #tpu.pipeline_mode<synchronous>, transform_indices = @transform_2, window_bounds = array<i64: 32, 128>}, {pipeline_mode = #tpu.pipeline_mode<synchronous>, transform_indices = @transform_3, window_bounds = array<i64: 1, 128>}, {transform_indices = @transform_4, window_bounds = array<i64: 16, 32>}]} {
    %c0 = arith.constant 0 : index
    %c0_0 = arith.constant 0 : index
    %0 = vector.load %arg1[%c0, %c0_0] : memref<16x32xf32, #tpu.memory_space<vmem>>, vector<16x32xf32>
    %c0_1 = arith.constant 0 : index
    %c0_2 = arith.constant 0 : index
    %1 = vector.load %arg2[%c0_1, %c0_2] : memref<32x4xf32, #tpu.memory_space<vmem>>, vector<32x4xf32>
    %cst = arith.constant dense<0.000000e+00> : vector<16x4xf32>
    %2 = tpu.matmul %0, %1, %cst {dimension_numbers = #tpu.dot_dimension_numbers<[1], [0], [0], [1], [0, 0, 1, 1], [], []>} : vector<16x32xf32>, vector<32x4xf32>, vector<16x4xf32> -> vector<16x4xf32>
    %cst_3 = arith.constant dense<0xFF800000> : vector<16xf32>
    %3 = vector.multi_reduction <maximumf>, %2, %cst_3 [1] : vector<16x4xf32> to vector<16xf32>
    %4 = vector.shape_cast %3 : vector<16xf32> to vector<16x1xf32>
    %5 = vector.broadcast %4 : vector<16x1xf32> to vector<16x4xf32>
    %6 = arith.subf %2, %5 : vector<16x4xf32>
    %7 = math.exp %6 : vector<16x4xf32>
    %cst_4 = arith.constant dense<0.000000e+00> : vector<16xf32>
    %8 = vector.multi_reduction <add>, %7, %cst_4 [1] : vector<16x4xf32> to vector<16xf32>
    %9 = vector.shape_cast %8 : vector<16xf32> to vector<16x1xf32>
    %10 = vector.broadcast %9 : vector<16x1xf32> to vector<16x4xf32>
    %11 = arith.divf %7, %10 : vector<16x4xf32>
    %c0_5 = arith.constant 0 : index
    %c0_6 = arith.constant 0 : index
    %12 = vector.load %arg3[%c0_5, %c0_6] : memref<32x128xf32, #tpu.memory_space<vmem>>, vector<32x128xf32>
    %cst_7 = arith.constant dense<0.000000e+00> : vector<16x128xf32>
    %13 = tpu.matmul %0, %12, %cst_7 {dimension_numbers = #tpu.dot_dimension_numbers<[1], [0], [0], [1], [0, 0, 1, 1], [], []>} : vector<16x32xf32>, vector<32x128xf32>, vector<16x128xf32> -> vector<16x128xf32>
    %c0_8 = arith.constant 0 : index
    %c0_9 = arith.constant 0 : index
    %14 = vector.load %arg4[%c0_8, %c0_9] : memref<1x128xf32, #tpu.memory_space<vmem>>, vector<1x128xf32>
    %15 = vector.broadcast %14 : vector<1x128xf32> to vector<16x128xf32>
    %16 = arith.addf %13, %15 : vector<16x128xf32>
    %17 = vector.extract_strided_slice %11 {offsets = [0, 0], sizes = [16, 1], strides = [1, 1]} : vector<16x4xf32> to vector<16x1xf32>
    %18 = vector.extract_strided_slice %16 {offsets = [0, 0], sizes = [16, 32], strides = [1, 1]} : vector<16x128xf32> to vector<16x32xf32>
    %19 = vector.broadcast %17 : vector<16x1xf32> to vector<16x32xf32>
    %20 = arith.mulf %19, %18 : vector<16x32xf32>
    %21 = vector.extract_strided_slice %11 {offsets = [0, 1], sizes = [16, 1], strides = [1, 1]} : vector<16x4xf32> to vector<16x1xf32>
    %22 = vector.extract_strided_slice %16 {offsets = [0, 32], sizes = [16, 32], strides = [1, 1]} : vector<16x128xf32> to vector<16x32xf32>
    %23 = vector.broadcast %21 : vector<16x1xf32> to vector<16x32xf32>
    %24 = arith.mulf %23, %22 : vector<16x32xf32>
    %25 = arith.addf %20, %24 : vector<16x32xf32>
    %26 = vector.extract_strided_slice %11 {offsets = [0, 2], sizes = [16, 1], strides = [1, 1]} : vector<16x4xf32> to vector<16x1xf32>
    %27 = vector.extract_strided_slice %16 {offsets = [0, 64], sizes = [16, 32], strides = [1, 1]} : vector<16x128xf32> to vector<16x32xf32>
    %28 = vector.broadcast %26 : vector<16x1xf32> to vector<16x32xf32>
    %29 = arith.mulf %28, %27 : vector<16x32xf32>
    %30 = arith.addf %25, %29 : vector<16x32xf32>
    %31 = vector.extract_strided_slice %11 {offsets = [0, 3], sizes = [16, 1], strides = [1, 1]} : vector<16x4xf32> to vector<16x1xf32>
    %32 = vector.extract_strided_slice %16 {offsets = [0, 96], sizes = [16, 32], strides = [1, 1]} : vector<16x128xf32> to vector<16x32xf32>
    %33 = vector.broadcast %31 : vector<16x1xf32> to vector<16x32xf32>
    %34 = arith.mulf %33, %32 : vector<16x32xf32>
    %35 = arith.addf %30, %34 : vector<16x32xf32>
    %c0_10 = arith.constant 0 : index
    %c0_11 = arith.constant 0 : index
    %36 = vector.load %arg5[%c0_10, %c0_11] : memref<16x32xf32, #tpu.memory_space<vmem>>, vector<16x32xf32>
    tpu.vector_store %arg5[%c0_10, %c0_11], %35 {strides = array<i32>} : memref<16x32xf32, #tpu.memory_space<vmem>>, vector<16x32xf32>,
    return
  }
  func.func @transform_0(%arg0: i32) -> (i32, i32) {
    %c0_i32 = arith.constant 0 : i32
    %c0_i32_0 = arith.constant 0 : i32
    return %arg0, %c0_i32 : i32, i32
  }
  func.func @transform_1(%arg0: i32) -> (i32, i32) {
    %c0_i32 = arith.constant 0 : i32
    %c0_i32_0 = arith.constant 0 : i32
    %c0_i32_1 = arith.constant 0 : i32
    return %c0_i32, %c0_i32_0 : i32, i32
  }
  func.func @transform_2(%arg0: i32) -> (i32, i32) {
    %c0_i32 = arith.constant 0 : i32
    %c0_i32_0 = arith.constant 0 : i32
    %c0_i32_1 = arith.constant 0 : i32
    return %c0_i32, %c0_i32_0 : i32, i32
  }
  func.func @transform_3(%arg0: i32) -> (i32, i32) {
    %c0_i32 = arith.constant 0 : i32
    %c0_i32_0 = arith.constant 0 : i32
    %c0_i32_1 = arith.constant 0 : i32
    return %c0_i32, %c0_i32_0 : i32, i32
  }
  func.func @transform_4(%arg0: i32) -> (i32, i32) {
    %c0_i32 = arith.constant 0 : i32
    %c0_i32_0 = arith.constant 0 : i32
    return %arg0, %c0_i32 : i32, i32
  }
}

</mosaic_0001>

<llo_original>
// kernel: tpu_custom_call.1
$region0: #{tpu_custom_call.1}
  #allocation0 [shape = 'u32[]', space=smem, size = 0x4, offset = 0x4, fixed_abs, tag = 'smem constant byte address 0x4 - core index']
  #allocation1 [shape = 'u32[72,128]{1,0:T(1,128)}', space=vmem, size = 0x9000, scoped, tag = 'internal scratch']
  %s0 = inlined_call_operand.hbm [shape: f32[16,32], index: 0, kind: input, shape index: {}]
  %s1 = inlined_call_operand.vmem [shape: f32[32,4], index: 1, kind: input, shape index: {}]
  %s2 = inlined_call_operand.vmem [shape: f32[32,128], index: 2, kind: input, shape index: {}]
  %s3 = inlined_call_operand.vmem [shape: f32[1,128], index: 3, kind: input, shape index: {}]
  %s4 = inlined_call_operand.hbm [shape: f32[16,32], index: 4, kind: output, shape index: {}]
  %s5 = sld [smem:[#allocation0]]
  $region30: #{tpu_custom_call.1} parent=0
    _
  %s7 = ssub.s32 1, %s5
  %s8 = scalar_select 0, %s7, %s5
  $region1: #{tpu_custom_call.1} parent=0
    #allocation2 [shape = 'u8[8192]{0}', space=vmem, size = 0x2000, scoped, tag = 'input window, operand 0, single buffered']
    #allocation3 [shape = 's32[1]{0}', space=sflag, size = 0x4, scoped, tag = 'scoped memory for tpu_custom_call.1']
    #allocation4 [shape = 's32[1]{0}', space=sflag, size = 0x4, scoped, tag = 'scoped memory for tpu_custom_call.1']
    #allocation5 [shape = 'u8[8192]{0}', space=vmem, size = 0x2000, scoped, tag = 'output window, operand 0, single buffered']
    %9 = vsyncpa [#allocation3], 0
    %10 = vsyncpa [#allocation4], 0
    // Predicated region
    $region2: #{tpu_custom_call.1} parent=1 // pred_check
      _
    $region3: #{tpu_custom_call.1} parent=1 // pred_check_branch
      %12 = sbr.rel (0) target = $region5
    $region4: #{tpu_custom_call.1} parent=1 // pred_region
      %14 = vsyncadd [#allocation3], 0
      %s15 = sshll.u32 %s0, 4
      %s16 = int_to_ptr.hbm [resolvable:$true] %s15
      %s17 = sshll.u32 [#allocation2], 4
      %s18 = int_to_ptr.vmem [resolvable:$true] %s17
      %23 = dma.hbm_to_vmem [thread:$0]  %s16, 256, %s18, [#allocation3], 128, 128, 8
    $region5: #{tpu_custom_call.1} parent=1 // pred_fallthru
      _
    // Predicated region
    $region6: #{tpu_custom_call.1} parent=1 // pred_check
      _
    $region7: #{tpu_custom_call.1} parent=1 // pred_check_branch
      %25 = sbr.rel (0) target = $region9
    $region8: #{tpu_custom_call.1} parent=1 // pred_region
      _
    $region9: #{tpu_custom_call.1} parent=1 // pred_fallthru
      _
    // Predicated region
    $region10: #{tpu_custom_call.1} parent=1 // pred_check
      _
    $region11: #{tpu_custom_call.1} parent=1 // pred_check_branch
      %27 = sbr.rel (0) target = $region13
    $region12: #{tpu_custom_call.1} parent=1 // pred_region
      _
    $region13: #{tpu_custom_call.1} parent=1 // pred_fallthru
      _
    // Predicated region
    $region14: #{tpu_custom_call.1} parent=1 // pred_check
      _
    $region15: #{tpu_custom_call.1} parent=1 // pred_check_branch
      %29 = sbr.rel (0) target = $region17
    $region16: #{tpu_custom_call.1} parent=1 // pred_region
      _
    $region17: #{tpu_custom_call.1} parent=1 // pred_fallthru
      _
    // Predicated region
    $region18: #{tpu_custom_call.1} parent=1 // pred_check
      _
    $region19: #{tpu_custom_call.1} parent=1 // pred_check_branch
      %31 = sbr.rel (0) target = $region21
    $region20: #{tpu_custom_call.1} parent=1 // pred_region
      %33 = dma.done [#allocation3], 256
    $region21: #{tpu_custom_call.1} parent=1 // pred_fallthru
      _
    %v34 = vld [vmem:[#allocation2] sm:$0xff]
    %v35 = vld [vmem:[#allocation2 + $0x8] sm:$0xff]
    %v36 = vld [vmem:[%s1] sm:$0xff]
    %v37 = vld [vmem:[%s1 + $0x8] sm:$0xff]
    %v38 = vld [vmem:[%s1 + $0x10] sm:$0xff]
    %v39 = vld [vmem:[%s1 + $0x18] sm:$0xff]
    %vm40 = vcmask 261120
    %v42 = vsel %vm40, %v34, 0
    %v45 = vsel %vm40, %v35, 0
    %47 = vmatpush.msra.mxu0 0.0
    %48 = vmatpush.msra.mxu0 0.0
    %49 = vmatpush.msra.mxu0 0.0
    %50 = vmatpush.msra.mxu0 0.0
    %51 = vmatpush.msra.mxu0 0.0
    %52 = vmatpush.msra.mxu0 0.0
    %53 = vmatpush.msra.mxu0 0.0
    %54 = vmatpush.msra.mxu0 0.0
    %55 = vmatpush.msra.mxu0 0.0
    %56 = vmatpush.msra.mxu0 0.0
    %57 = vmatpush.msra.mxu0 0.0
    %58 = vmatpush.msra.mxu0 0.0
    %59 = vmatpush.msra.mxu0 %v39
    %60 = vmatpush.msra.mxu0 %v38
    %61 = vmatpush.msra.mxu0 %v37
    %62 = vmatpush.msra.mxu0 %v36
    %63 = vmatmul.f32.gmra.mxu0 %v42
    %v64 = vpop.f32.mrf.mxu0
    %v65 = vadd.f32 0.0, %v64
    %66 = vmatmul.f32.gmra.mxu0 %v45
    %v67 = vpop.f32.mrf.mxu0
    %v68 = vadd.f32 0.0, %v67
    %69 = vdwg.mxu0
    %vm70 = vcmask 31744
    %v71 = vsel %vm70, %v65, -inf
    %72 = vmax.xlane.f32.xlu0 %v71
    %v73 = vpop.xlane.xlu0 %72
    %v74 = vsel %vm70, %v68, -inf
    %75 = vmax.xlane.f32.xlu0 %v74
    %v76 = vpop.xlane.xlu0 %75
    %v77 = vsub.f32 %v65, %v73
    %v78 = vsub.f32 %v68, %v76
    %v79 = vmul.f32 %v77, 1.442695
    %v80 = vpow.pop %v79
    %v81 = vmul.f32 %v78, 1.442695
    %v82 = vpow.pop %v81
    %v83 = vsel %vm70, %v80, 0.0
    %84 = vadd.xlane.f32.xlu0 %v83
    %v85 = vpop.xlane.xlu0 %84
    %v86 = vsel %vm70, %v82, 0.0
    %87 = vadd.xlane.f32.xlu0 %v86
    %v88 = vpop.xlane.xlu0 %87
    %v89 = vrcp.pop %v85
    %v90 = vmul.f32 %v85, %v89
    %v91 = vsub.f32 1.0, %v90
    %v92 = vmul.f32 %v89, %v91
    %v93 = vadd.f32 %v89, %v92
    %vm94 = vweird.f32 %v85
    %vm95 = vweird.f32 %v89
    %vm96 = vmor %vm94, %vm95
    %v97 = vsel %vm96, %v89, %v93
    %v98 = vand.u32 2147483647, %v85
    %vm99 = vcmp.eq.f32.partialorder %v98, 8.507059e+37
    %v100 = vand.u32 %v85, 2147483648
    %v101 = vor.u32 1.1754944e-38, %v100
    %v102 = vsel %vm99, %v101, %v97
    %v103 = vmul.f32 %v80, %v102
    %v104 = vrcp.pop %v88
    %v105 = vmul.f32 %v88, %v104
    %v106 = vsub.f32 1.0, %v105
    %v107 = vmul.f32 %v104, %v106
    %v108 = vadd.f32 %v104, %v107
    %vm109 = vweird.f32 %v88
    %vm110 = vweird.f32 %v104
    %vm111 = vmor %vm109, %vm110
    %v112 = vsel %vm111, %v104, %v108
    %v113 = vand.u32 2147483647, %v88
    %vm114 = vcmp.eq.f32.partialorder %v113, 8.507059e+37
    %v115 = vand.u32 %v88, 2147483648
    %v116 = vor.u32 1.1754944e-38, %v115
    %v117 = vsel %vm114, %v116, %v112
    %v118 = vmul.f32 %v82, %v117
    %v119 = vld [vmem:[%s2] sm:$0xff]
    %v120 = vld [vmem:[%s2 + $0x8] sm:$0xff]
    %v121 = vld [vmem:[%s2 + $0x10] sm:$0xff]
    %v122 = vld [vmem:[%s2 + $0x18] sm:$0xff]
    %v123 = vld [vmem:[%s3] sm:$0x1]
    %v125 = vperm.slane %v123, 0
    %127 = vmatpush.msra.mxu0 0.0
    %128 = vmatpush.msra.mxu0 0.0
    %129 = vmatpush.msra.mxu0 0.0
    %130 = vmatpush.msra.mxu0 0.0
    %131 = vmatpush.msra.mxu0 0.0
    %132 = vmatpush.msra.mxu0 0.0
    %133 = vmatpush.msra.mxu0 0.0
    %134 = vmatpush.msra.mxu0 0.0
    %135 = vmatpush.msra.mxu0 0.0
    %136 = vmatpush.msra.mxu0 0.0
    %137 = vmatpush.msra.mxu0 0.0
    %138 = vmatpush.msra.mxu0 0.0
    %139 = vmatpush.msra.mxu0 %v122
    %140 = vmatpush.msra.mxu0 %v121
    %141 = vmatpush.msra.mxu0 %v120
    %142 = vmatpush.msra.mxu0 %v119
    %143 = vmatmul.f32.gmra.mxu0 %v42
    %v144 = vpop.f32.mrf.mxu0
    %v145 = vadd.f32 %v125, %v144
    %146 = vmatmul.f32.gmra.mxu0 %v45
    %v147 = vpop.f32.mrf.mxu0
    %v148 = vadd.f32 %v125, %v147
    %149 = vdwg.mxu0
    %151 = vset.pattern.permute.xlu0 0
    %152 = vperm.xlu0 %151, %v103
    %v153 = vpop.permute.xlu0 %152
    %156 = vset.pattern.permute.xlu0 0
    %157 = vperm.xlu0 %156, %v118
    %v158 = vpop.permute.xlu0 %157
    %v160 = vmul.f32 %v153, %v145
    %v161 = vmul.f32 %v158, %v148
    %162 = vset.pattern.permute.xlu0 1
    %163 = vperm.xlu0 %162, %v103
    %v164 = vpop.permute.xlu0 %163
    %166 = vset.pattern.permute.xlu0 1
    %167 = vperm.xlu0 %166, %v118
    %v168 = vpop.permute.xlu0 %167
    %v170 = vmul.f32 %v164, %v145
    %v171 = vmul.f32 %v168, %v148
    %174 = vrot.lane.b32.xlu0 %v170, 96
    %v175 = vpop.permute.xlu0 %174
    %176 = vrot.lane.b32.xlu0 %v171, 96
    %v177 = vpop.permute.xlu0 %176
    %v180 = vadd.f32 %v160, %v175
    %v181 = vadd.f32 %v161, %v177
    %182 = vset.pattern.permute.xlu0 2
    %183 = vperm.xlu0 %182, %v103
    %v184 = vpop.permute.xlu0 %183
    %186 = vset.pattern.permute.xlu0 2
    %187 = vperm.xlu0 %186, %v118
    %v188 = vpop.permute.xlu0 %187
    %v190 = vmul.f32 %v184, %v145
    %v191 = vmul.f32 %v188, %v148
    %194 = vrot.lane.b32.xlu0 %v190, 64
    %v195 = vpop.permute.xlu0 %194
    %196 = vrot.lane.b32.xlu0 %v191, 64
    %v197 = vpop.permute.xlu0 %196
    %v200 = vadd.f32 %v180, %v195
    %v201 = vadd.f32 %v181, %v197
    %202 = vset.pattern.permute.xlu0 3
    %203 = vperm.xlu0 %202, %v103
    %v204 = vpop.permute.xlu0 %203
    %206 = vset.pattern.permute.xlu0 3
    %207 = vperm.xlu0 %206, %v118
    %v208 = vpop.permute.xlu0 %207
    %v210 = vmul.f32 %v204, %v145
    %v211 = vmul.f32 %v208, %v148
    %214 = vrot.lane.b32.xlu0 %v210, 32
    %v215 = vpop.permute.xlu0 %214
    %216 = vrot.lane.b32.xlu0 %v211, 32
    %v217 = vpop.permute.xlu0 %216
    %v220 = vadd.f32 %v200, %v215
    %v221 = vadd.f32 %v201, %v217
    %222 = vst.msk [vmem:[#allocation5] sm:$0xff] %vm40, %v220
    %223 = vst.msk [vmem:[#allocation5 + $0x8] sm:$0xff] %vm40, %v221
    // Predicated region
    $region22: #{tpu_custom_call.1} parent=1 // pred_check
      _
    $region23: #{tpu_custom_call.1} parent=1 // pred_check_branch
      %225 = sbr.rel (0) target = $region25
    $region24: #{tpu_custom_call.1} parent=1 // pred_region
      %227 = vsyncadd [#allocation4], 0
      %s228 = sshll.u32 [#allocation5], 4
      %s229 = int_to_ptr.vmem [resolvable:$true] %s228
      %s230 = sshll.u32 %s4, 4
      %s231 = int_to_ptr.hbm [resolvable:$true] %s230
      %236 = dma.vmem_to_hbm [thread:$0]  %s229, 256, %s231, [#allocation4], 128, 128, 8
    $region25: #{tpu_custom_call.1} parent=1 // pred_fallthru
      _
    // Predicated region
    $region26: #{tpu_custom_call.1} parent=1 // pred_check
      _
    $region27: #{tpu_custom_call.1} parent=1 // pred_check_branch
      %238 = sbr.rel (0) target = $region29
    $region28: #{tpu_custom_call.1} parent=1 // pred_region
      %240 = dma.done [#allocation4], 256
    $region29: #{tpu_custom_call.1} parent=1 // pred_fallthru
      _
    %241 = vsyncpa [#allocation3], 1
    %242 = vsyncpa [#allocation4], 1

</llo_original>
